<compile_context>
chip_gen: v6e
topology: v6e:2x2x1
jax: 0.10.0
libtpu: 0.0.40
codegen_flags: <defaults>
</compile_context>

<pallas_src>
import functools

import jax
import jax.numpy as jnp
from jax import lax
from jax.experimental import pallas as pl
from jax.experimental.pallas import tpu as pltpu


def _round_up(x, m):
    return ((x + m - 1) // m) * m


# ---------------------------------------------------------------------------
# Kernels
# ---------------------------------------------------------------------------
def _ln_rows_kernel(x_ref, w_ref, b_ref, o_ref, *, eps):
    """LayerNorm over the last (lane) axis of a (rows, C) block."""
    x = x_ref[...].astype(jnp.float32)
    mean = jnp.mean(x, axis=-1, keepdims=True)
    xc = x - mean
    var = jnp.mean(xc * xc, axis=-1, keepdims=True)          # biased variance
    inv = lax.rsqrt(var + eps)
    w = w_ref[...].astype(jnp.float32)                       # (1, C)
    b = b_ref[...].astype(jnp.float32)
    o_ref[...] = (xc * (inv * w) + b).astype(o_ref.dtype)


def _ln_rows_packed_kernel(x_ref, w_ref, b_ref, m_ref, o_ref, *, eps):
    """Lane-packed LayerNorm: k = 128 // C rows per 128-wide lane row.

    Per-row mean/variance become segmented reductions implemented as matmuls
    with a block-diagonal averaging matrix (idle MXU), keeping every load and
    store lane-dense (last dim = 128) instead of masked C-wide stores."""
    x = x_ref[...].astype(jnp.float32)                       # (rows_p, k*C)
    m = m_ref[...]                                           # (k*C, k*C)
    mean = jnp.dot(x, m, preferred_element_type=jnp.float32,
                   precision=lax.Precision.HIGHEST)
    xc = x - mean
    var = jnp.dot(xc * xc, m, preferred_element_type=jnp.float32,
                  precision=lax.Precision.HIGHEST)
    inv = lax.rsqrt(var + eps)
    w = w_ref[...].astype(jnp.float32)                       # (1, k*C) tiled
    b = b_ref[...].astype(jnp.float32)
    o_ref[...] = (xc * (inv * w) + b).astype(o_ref.dtype)


def _ln_cfirst_kernel(x_ref, w_ref, b_ref, o_ref, *, eps):
    """LayerNorm over the channel (sublane) axis of a (1, C, S_block) block."""
    x = x_ref[...].astype(jnp.float32)                       # (1, C, bs)
    mean = jnp.mean(x, axis=1, keepdims=True)                # (1, 1, bs)
    xc = x - mean
    var = jnp.mean(xc * xc, axis=1, keepdims=True)
    inv = lax.rsqrt(var + eps)
    w = w_ref[...].astype(jnp.float32)                       # (1, C, 1)
    b = b_ref[...].astype(jnp.float32)
    o_ref[...] = (xc * (inv * w) + b).astype(o_ref.dtype)


# ---------------------------------------------------------------------------
# Tile-size selection (sized against the 32 MiB scoped-VMEM default so the
# same tiling is valid on v5e / v6e / v7x; ~2 MiB per input tile keeps
# in+out double-buffering around 8 MiB with plenty of headroom).
# ---------------------------------------------------------------------------
_TARGET_TILE_BYTES = 2 << 20


def _pick_block_rows(n, lane_width, itemsize):
    row_mult = 8 if itemsize >= 4 else 16
    bytes_per_row = max(1, lane_width * max(itemsize, 4))
    rows = max(row_mult,
               (_TARGET_TILE_BYTES // bytes_per_row) // row_mult * row_mult)
    # Keep >= ~4 grid steps when n is large enough so the "parallel" row axis
    # can feed both TensorCores on v7x.
    rows = min(rows, _round_up(max(1, n // 4), row_mult))
    if rows >= n:
        return n
    return max(row_mult, rows)


def _pick_block_lanes(s, c, itemsize):
    bytes_per_lane = max(1, c * max(itemsize, 4))
    lanes = max(128, (_TARGET_TILE_BYTES // bytes_per_lane) // 128 * 128)
    lanes = min(lanes, _round_up(max(1, s // 4), 128))
    if lanes >= s:
        return s
    return max(128, lanes)


# ---------------------------------------------------------------------------
# channels_last: row-wise LayerNorm over the trailing axis
# ---------------------------------------------------------------------------
def _ln_rows_plain(x2d, weight, bias, eps):
    n, c = x2d.shape
    block_rows = _pick_block_rows(n, c, x2d.dtype.itemsize)
    w2 = weight.reshape(1, c).astype(jnp.float32)
    b2 = bias.reshape(1, c).astype(jnp.float32)
    grid = (pl.cdiv(n, block_rows),)          # ragged last block handled by Pallas
    return pl.pallas_call(
        functools.partial(_ln_rows_kernel, eps=eps),
        out_shape=jax.ShapeDtypeStruct((n, c), x2d.dtype),
        grid_spec=pltpu.PrefetchScalarGridSpec(
            num_scalar_prefetch=0,
            grid=grid,
            in_specs=[
                pl.BlockSpec((block_rows, c), lambda i: (i, 0)),
                pl.BlockSpec((1, c), lambda i: (0, 0)),
                pl.BlockSpec((1, c), lambda i: (0, 0)),
            ],
            out_specs=pl.BlockSpec((block_rows, c), lambda i: (i, 0)),
        ),
        compiler_params=pltpu.CompilerParams(
            dimension_semantics=("parallel",)),
    )(x2d, w2, b2)


def _ln_rows_packed(x2d, weight, bias, eps):
    n, c = x2d.shape
    k = 128 // c
    n_p = n // k
    xp = x2d.reshape(n_p, k * c)              # contiguous -> free reshape
    wp = jnp.tile(weight.reshape(1, c).astype(jnp.float32), (1, k))
    bp = jnp.tile(bias.reshape(1, c).astype(jnp.float32), (1, k))
    seg = jnp.arange(k * c, dtype=jnp.int32) // c
    m = (seg[:, None] == seg[None, :]).astype(jnp.float32) / float(c)
    block_rows = _pick_block_rows(n_p, k * c, x2d.dtype.itemsize)
    grid = (pl.cdiv(n_p, block_rows),)
    out = pl.pallas_call(
        functools.partial(_ln_rows_packed_kernel, eps=eps),
        out_shape=jax.ShapeDtypeStruct((n_p, k * c), x2d.dtype),
        grid_spec=pltpu.PrefetchScalarGridSpec(
            num_scalar_prefetch=0,
            grid=grid,
            in_specs=[
                pl.BlockSpec((block_rows, k * c), lambda i: (i, 0)),
                pl.BlockSpec((1, k * c), lambda i: (0, 0)),
                pl.BlockSpec((1, k * c), lambda i: (0, 0)),
                pl.BlockSpec((k * c, k * c), lambda i: (0, 0)),
            ],
            out_specs=pl.BlockSpec((block_rows, k * c), lambda i: (i, 0)),
        ),
        compiler_params=pltpu.CompilerParams(
            dimension_semantics=("parallel",)),
    )(xp, wp, bp, m)
    return out.reshape(n, c)


def _ln_rows(x2d, weight, bias, eps):
    n, c = x2d.shape
    # Lane-packed path only when rows pack exactly into 128-wide lane rows.
    if c < 128 and 128 % c == 0 and n >= (128 // c) and n % (128 // c) == 0:
        return _ln_rows_packed(x2d, weight, bias, eps)
    return _ln_rows_plain(x2d, weight, bias, eps)


# ---------------------------------------------------------------------------
# channels_first: LayerNorm over axis 1, computed in place on NC... layout
# (no wrapper transposes; channels live in sublanes, spatial/seq in lanes)
# ---------------------------------------------------------------------------
def layer_norm_channels_first(x, weight, bias, eps=1e-6):
    orig_shape = x.shape
    bsz, c = orig_shape[0], orig_shape[1]
    s = 1
    for d in orig_shape[2:]:
        s *= d
    x3 = x.reshape(bsz, c, s)                 # contiguous -> free reshape
    block_s = _pick_block_lanes(s, c, x.dtype.itemsize)
    w3 = weight.reshape(1, c, 1).astype(jnp.float32)
    b3 = bias.reshape(1, c, 1).astype(jnp.float32)
    grid = (bsz, pl.cdiv(s, block_s))
    out = pl.pallas_call(
        functools.partial(_ln_cfirst_kernel, eps=eps),
        out_shape=jax.ShapeDtypeStruct((bsz, c, s), x.dtype),
        grid_spec=pltpu.PrefetchScalarGridSpec(
            num_scalar_prefetch=0,
            grid=grid,
            in_specs=[
                pl.BlockSpec((1, c, block_s), lambda i, j: (i, 0, j)),
                pl.BlockSpec((1, c, 1), lambda i, j: (0, 0, 0)),
                pl.BlockSpec((1, c, 1), lambda i, j: (0, 0, 0)),
            ],
            out_specs=pl.BlockSpec((1, c, block_s), lambda i, j: (i, 0, j)),
        ),
        compiler_params=pltpu.CompilerParams(
            dimension_semantics=("parallel", "parallel")),
    )(x3, w3, b3)
    return out.reshape(orig_shape)


def layer_norm(x, weight, bias, eps=1e-6, data_format="channels_last"):
    """Pallas equivalent of deco_convnet.LayerNorm (both data formats)."""
    if data_format == "channels_last":
        orig_shape = x.shape
        c = orig_shape[-1]
        y = _ln_rows(x.reshape(-1, c), weight, bias, eps)
        return y.reshape(orig_shape)
    elif data_format == "channels_first":
        return layer_norm_channels_first(x, weight, bias, eps)
    else:
        raise NotImplementedError


# ---------------------------------------------------------------------------
# DecoDecoder.forward
# ---------------------------------------------------------------------------
def deco_decoder_forward(tgt, memory, d_model, mask, query_pos=None, *,
                         layers=(), norm_weight=None, norm_bias=None,
                         eps=1e-6, return_intermediate=False):
    """JAX/Pallas equivalent of DecoDecoder.forward.

    `tgt` / `output` are channels-first (B, d_model, qN) query feature maps.
    """
    output = tgt
    intermediate = []
    # TODO(synk): DecoDecoderLayer is an external module passed to the ctor
    # (not in this spec); callers supply `layers` as JAX callables.
    for layer in layers:
        output, mask = layer(output, memory, mask=mask, query_pos=query_pos)
        if return_intermediate and norm_weight is not None:
            # Literal translation of PyTorch `self.norm(output)`: LayerNorm
            # over the trailing axis of the (still channels-first) tensor.
            intermediate.append(layer_norm(output, norm_weight, norm_bias,
                                           eps, data_format="channels_last"))
    if norm_weight is not None:
        # PyTorch: self.norm(output.permute(0, 2, 1)).permute(0, 2, 1)
        # == LayerNorm over the channel axis, fused into one kernel on the
        # channels-first layout (no transposes, no extra HBM round-trips).
        output = layer_norm_channels_first(output, norm_weight, norm_bias, eps)
        if return_intermediate:
            if intermediate:
                intermediate.pop()
            intermediate.append(output)
    if return_intermediate:
        return jnp.stack(intermediate)
    return output, mask


# ---------------------------------------------------------------------------
# References + demo
# ---------------------------------------------------------------------------
def _ref_layer_norm_last(x, w, b, eps):
    mean = jnp.mean(x, axis=-1, keepdims=True)
    var = jnp.mean((x - mean) ** 2, axis=-1, keepdims=True)
    return (x - mean) / jnp.sqrt(var + eps) * w + b


def _ref_deco_decoder_norm(x, w, b, eps):
    xt = jnp.transpose(x, (0, 2, 1))
    return jnp.transpose(_ref_layer_norm_last(xt, w, b, eps), (0, 2, 1))


if __name__ == "__main__":
    key = jax.random.PRNGKey(0)
    B, C, Q = 2, 32, 64            # batch, d_model, number of queries (small)

    # deterministic nontrivial norm parameters, nn.Parameter shape (C,)
    weight = 1.0 + 0.01 * jnp.arange(C, dtype=jnp.float32)
    bias = -0.02 * jnp.arange(C, dtype=jnp.float32)

    k1, k2, k3, k4 = jax.random.split(key, 4)
    tgt = jax.random.normal(k1, (B, C, Q), dtype=jnp.float32)       # (B, d_model, qN)
    memory = jax.random.normal(k2, (B, C, 16, 16), dtype=jnp.float32)

    # DecoDecoder.forward (no decoder layers supplied) + final norm
    out, out_mask = deco_decoder_forward(tgt, memory, C, None,
                                         norm_weight=weight, norm_bias=bias,
                                         eps=1e-6)
    jax.block_until_ready(out)
    ref = _ref_deco_decoder_norm(tgt, weight, bias, 1e-6)
    assert out.shape == tgt.shape and out.dtype == tgt.dtype
    assert jnp.allclose(out, ref, atol=1e-5, rtol=1e-5)

    # standalone LayerNorm paths (channels_last small-C lane-packed kernel,
    # channels_first 4D kernel)
    x_cl = jax.random.normal(k3, (2, 8, 8, C), dtype=jnp.float32)
    x_cf = jax.random.normal(k4, (2, C, 8, 8), dtype=jnp.float32)
    y_cl = layer_norm(x_cl, weight, bias, eps=1e-6, data_format="channels_last")
    y_cf = layer_norm(x_cf, weight, bias, eps=1e-6, data_format="channels_first")
    jax.block_until_ready((y_cl, y_cf))

    ref_cl = _ref_layer_norm_last(x_cl, weight, bias, 1e-6)
    mean = jnp.mean(x_cf, axis=1, keepdims=True)
    var = jnp.mean((x_cf - mean) ** 2, axis=1, keepdims=True)
    ref_cf = ((x_cf - mean) / jnp.sqrt(var + 1e-6)
              * weight[:, None, None] + bias[:, None, None])

    assert y_cl.shape == x_cl.shape and y_cl.dtype == x_cl.dtype
    assert y_cf.shape == x_cf.shape and y_cf.dtype == x_cf.dtype
    assert jnp.allclose(y_cl, ref_cl, atol=1e-5, rtol=1e-5)
    assert jnp.allclose(y_cf, ref_cf, atol=1e-5, rtol=1e-5)

    print("KERNEL_OK")
</pallas_src>

<mosaic_0001>
module attributes {stable_mosaic.version = 11 : i64} {
  func.func @_ln_cfirst_kernel(%arg0: i32, %arg1: i32, %arg2: memref<1x32x64xf32, #tpu.memory_space<vmem>>, %arg3: memref<1x32x1xf32, #tpu.memory_space<vmem>>, %arg4: memref<1x32x1xf32, #tpu.memory_space<vmem>>, %arg5: memref<1x32x64xf32, #tpu.memory_space<vmem>>) attributes {dimension_semantics = [#tpu.dimension_semantics<parallel>, #tpu.dimension_semantics<parallel>], iteration_bounds = array<i64: 2, 1>, scalar_prefetch = 0 : i64, scratch_operands = 0 : i64, tpu.core_type = #tpu.core_type<tc>, window_params = [{transform_indices = @transform_0, window_bounds = array<i64: 1, 32, 64>}, {pipeline_mode = #tpu.pipeline_mode<synchronous>, transform_indices = @transform_1, window_bounds = array<i64: 1, 32, 1>}, {pipeline_mode = #tpu.pipeline_mode<synchronous>, transform_indices = @transform_2, window_bounds = array<i64: 1, 32, 1>}, {transform_indices = @transform_3, window_bounds = array<i64: 1, 32, 64>}]} {
    %c0 = arith.constant 0 : index
    %c0_0 = arith.constant 0 : index
    %c0_1 = arith.constant 0 : index
    %0 = vector.load %arg2[%c0, %c0_0, %c0_1] : memref<1x32x64xf32, #tpu.memory_space<vmem>>, vector<1x32x64xf32>
    %cst = arith.constant dense<0.000000e+00> : vector<1x64xf32>
    %1 = vector.multi_reduction <add>, %0, %cst [1] : vector<1x32x64xf32> to vector<1x64xf32>
    %2 = vector.shape_cast %1 : vector<1x64xf32> to vector<1x1x64xf32>
    %cst_2 = arith.constant 3.200000e+01 : f32
    %3 = vector.broadcast %cst_2 : f32 to vector<1x1x64xf32>
    %4 = arith.divf %2, %3 : vector<1x1x64xf32>
    %5 = vector.broadcast %4 : vector<1x1x64xf32> to vector<1x32x64xf32>
    %6 = arith.subf %0, %5 : vector<1x32x64xf32>
    %7 = arith.mulf %6, %6 : vector<1x32x64xf32>
    %cst_3 = arith.constant dense<0.000000e+00> : vector<1x64xf32>
    %8 = vector.multi_reduction <add>, %7, %cst_3 [1] : vector<1x32x64xf32> to vector<1x64xf32>
    %9 = vector.shape_cast %8 : vector<1x64xf32> to vector<1x1x64xf32>
    %cst_4 = arith.constant 3.200000e+01 : f32
    %10 = vector.broadcast %cst_4 : f32 to vector<1x1x64xf32>
    %11 = arith.divf %9, %10 : vector<1x1x64xf32>
    %cst_5 = arith.constant 9.99999997E-7 : f32
    %12 = vector.broadcast %cst_5 : f32 to vector<1x1x64xf32>
    %13 = arith.addf %11, %12 : vector<1x1x64xf32>
    %14 = math.rsqrt %13 : vector<1x1x64xf32>
    %c0_6 = arith.constant 0 : index
    %c0_7 = arith.constant 0 : index
    %c0_8 = arith.constant 0 : index
    %15 = vector.load %arg3[%c0_6, %c0_7, %c0_8] : memref<1x32x1xf32, #tpu.memory_space<vmem>>, vector<1x32x1xf32>
    %c0_9 = arith.constant 0 : index
    %c0_10 = arith.constant 0 : index
    %c0_11 = arith.constant 0 : index
    %16 = vector.load %arg4[%c0_9, %c0_10, %c0_11] : memref<1x32x1xf32, #tpu.memory_space<vmem>>, vector<1x32x1xf32>
    %17 = vector.broadcast %14 : vector<1x1x64xf32> to vector<1x32x64xf32>
    %18 = vector.broadcast %15 : vector<1x32x1xf32> to vector<1x32x64xf32>
    %19 = arith.mulf %17, %18 : vector<1x32x64xf32>
    %20 = arith.mulf %6, %19 : vector<1x32x64xf32>
    %21 = vector.broadcast %16 : vector<1x32x1xf32> to vector<1x32x64xf32>
    %22 = arith.addf %20, %21 : vector<1x32x64xf32>
    %c0_12 = arith.constant 0 : index
    %c0_13 = arith.constant 0 : index
    %c0_14 = arith.constant 0 : index
    %23 = vector.load %arg5[%c0_12, %c0_13, %c0_14] : memref<1x32x64xf32, #tpu.memory_space<vmem>>, vector<1x32x64xf32>
    tpu.vector_store %arg5[%c0_12, %c0_13, %c0_14], %22 {strides = array<i32>} : memref<1x32x64xf32, #tpu.memory_space<vmem>>, vector<1x32x64xf32>,
    return
  }
  func.func @transform_0(%arg0: i32, %arg1: i32) -> (i32, i32, i32) {
    %c0_i32 = arith.constant 0 : i32
    %c0_i32_0 = arith.constant 0 : i32
    return %arg0, %c0_i32, %arg1 : i32, i32, i32
  }
  func.func @transform_1(%arg0: i32, %arg1: i32) -> (i32, i32, i32) {
    %c0_i32 = arith.constant 0 : i32
    %c0_i32_0 = arith.constant 0 : i32
    %c0_i32_1 = arith.constant 0 : i32
    %c0_i32_2 = arith.constant 0 : i32
    return %c0_i32, %c0_i32_0, %c0_i32_1 : i32, i32, i32
  }
  func.func @transform_2(%arg0: i32, %arg1: i32) -> (i32, i32, i32) {
    %c0_i32 = arith.constant 0 : i32
    %c0_i32_0 = arith.constant 0 : i32
    %c0_i32_1 = arith.constant 0 : i32
    %c0_i32_2 = arith.constant 0 : i32
    return %c0_i32, %c0_i32_0, %c0_i32_1 : i32, i32, i32
  }
  func.func @transform_3(%arg0: i32, %arg1: i32) -> (i32, i32, i32) {
    %c0_i32 = arith.constant 0 : i32
    %c0_i32_0 = arith.constant 0 : i32
    return %arg0, %c0_i32, %arg1 : i32, i32, i32
  }
}

</mosaic_0001>

<llo_original>
// kernel: tpu_custom_call.1
$region0: #{tpu_custom_call.1}
  #allocation0 [shape = 'u32[]', space=smem, size = 0x4, offset = 0x4, fixed_abs, tag = 'smem constant byte address 0x4 - core index']
  #allocation1 [shape = 'u32[144,128]{1,0:T(1,128)}', space=vmem, size = 0x12000, scoped, tag = 'internal scratch']
  %s0 = inlined_call_operand.vmem [shape: f32[2,32,64], index: 0, kind: input, shape index: {}]
  %s1 = inlined_call_operand.vmem [shape: f32[1,32,1], index: 1, kind: input, shape index: {}]
  %s2 = inlined_call_operand.vmem [shape: f32[1,32,1], index: 2, kind: input, shape index: {}]
  %s3 = inlined_call_operand.hbm [shape: f32[2,32,64], index: 3, kind: output, shape index: {}]
  %s4 = sld [smem:[#allocation0]]
  $region45: #{tpu_custom_call.1} parent=0
    _
  %s6 = ssub.s32 1, %s4
  %s7 = scalar_select 0, %s6, %s4
  $region1: #{tpu_custom_call.1} parent=0
    #allocation2 [shape = 'u8[32768]{0}', space=vmem, size = 0x8000, scoped, tag = 'output window, operand 0']
    #allocation3 [shape = 's32[2]{0}', space=sflag, size = 0x8, scoped, tag = 'scoped memory for tpu_custom_call.1']
    %8 = vsyncpa [#allocation3], 0
    %s9 = scalar_lea.sflag [#allocation3], 1
    %10 = vsyncpa %s9, 0
    loop: start=0, step=1, limit=4
    $region2: #{tpu_custom_call.1} parent=1 // loop_pre_header
      _
    $region3: #{tpu_custom_call.1} parent=1 // loop_header
      %s12 = sphi 0, %s16
      %p13 = scmp.ge.s32.totalorder %s12, 4
      %s19 = sphi 0, %s31
      %s20 = sphi 0, %s27
      %s21 = sphi 0, %s19
      %s22 = sphi 0, %s20
      %s23 = sphi 0, %s21
      %s24 = sphi 0, %s22
      %s36 = sphi 0, %s38
      %s39 = sphi 0, %s36
      %s40 = sphi 0, %s39
      %s56 = sphi 0, %s40
      %s60 = sphi 0, %s60
      %s62 = sphi 0, %s60
      %s63 = sphi 0, %s62
      %s77 = sphi 0, %s63
      %s81 = sphi 0, %s81
      %s83 = sphi 0, %s81
      %s84 = sphi 0, %s83
      %s98 = sphi 0, %s84
      %s106 = sphi 0, %s108
      %s109 = sphi 0, %s106
      %s110 = sphi 0, %s109
      %s126 = sphi 0, %s110
    $region4: #{tpu_custom_call.1} parent=1 // loop_header_branch
      %15 = sbr.rel (%p13) target = $region8
    $region5: #{tpu_custom_call.1} parent=1 // loop_body
      %s17 = ssub.s32 %s12, 1
      %s18 = ssub.s32 %s12, 2
      %s25 = sadd.s32 1, %s20
      %p26 = scmp.ge.s32.totalorder %s25, 1
      %s27 = scalar_select %p26, 0, %s25
      %s28 = sadd.s32 1, %s19
      %s29 = scalar_select %p26, %s28, %s19
      %p30 = scmp.ge.s32.totalorder %s29, 2
      %s31 = scalar_select %p30, 0, %s29
      %s32 = ssub.s32 %s19, %s31
      %s33 = ssub.s32 %s20, %s27
      %s34 = sor.u32 %s32, %s33
      %p35 = scmp.eq.s32.totalorder %s34, 0
      %s37 = sadd.s32 %s36, 1
      %s38 = scalar_select %p35, %s36, %s37
      %p41 = pneg %p35
      %p42 = scmp.eq.s32.totalorder %s12, 1
      %p43 = por %p41, %p42
      %p44 = scmp.ne.s32.totalorder %s36, %s39
      %p45 = scmp.eq.s32.totalorder %s12, 0
      %p46 = por %p44, %p45
      %p47 = scmp.ne.s32.totalorder %s36, %s39
      %p48 = scmp.eq.s32.totalorder %s17, 1
      %p49 = por %p47, %p48
      %p50 = scmp.ne.s32.totalorder %s39, %s40
      %p51 = scmp.eq.s32.totalorder %s17, 0
      %p52 = por %p50, %p51
      %p53 = scmp.ne.s32.totalorder %s39, %s40
      %p54 = scmp.eq.s32.totalorder %s18, 1
      %p55 = por %p53, %p54
      %p57 = scmp.ne.s32.totalorder %s40, %s56
      %p58 = scmp.eq.s32.totalorder %s18, 0
      %p59 = por %p57, %p58
      %s61 = sadd.s32 %s60, 1
      %p64 = scmp.eq.s32.totalorder %s12, 1
      %p65 = scmp.ne.s32.totalorder %s60, %s62
      %p66 = scmp.eq.s32.totalorder %s12, 0
      %p67 = por %p65, %p66
      %p68 = scmp.ne.s32.totalorder %s60, %s62
      %p69 = scmp.eq.s32.totalorder %s17, 1
      %p70 = por %p68, %p69
      %p71 = scmp.ne.s32.totalorder %s62, %s63
      %p72 = scmp.eq.s32.totalorder %s17, 0
      %p73 = por %p71, %p72
      %p74 = scmp.ne.s32.totalorder %s62, %s63
      %p75 = scmp.eq.s32.totalorder %s18, 1
      %p76 = por %p74, %p75
      %p78 = scmp.ne.s32.totalorder %s63, %s77
      %p79 = scmp.eq.s32.totalorder %s18, 0
      %p80 = por %p78, %p79
      %s82 = sadd.s32 %s81, 1
      %p85 = scmp.eq.s32.totalorder %s12, 1
      %p86 = scmp.ne.s32.totalorder %s81, %s83
      %p87 = scmp.eq.s32.totalorder %s12, 0
      %p88 = por %p86, %p87
      %p89 = scmp.ne.s32.totalorder %s81, %s83
      %p90 = scmp.eq.s32.totalorder %s17, 1
      %p91 = por %p89, %p90
      %p92 = scmp.ne.s32.totalorder %s83, %s84
      %p93 = scmp.eq.s32.totalorder %s17, 0
      %p94 = por %p92, %p93
      %p95 = scmp.ne.s32.totalorder %s83, %s84
      %p96 = scmp.eq.s32.totalorder %s18, 1
      %p97 = por %p95, %p96
      %p99 = scmp.ne.s32.totalorder %s84, %s98
      %p100 = scmp.eq.s32.totalorder %s18, 0
      %p101 = por %p99, %p100
      %s102 = ssub.s32 %s19, %s31
      %s103 = ssub.s32 %s20, %s27
      %s104 = sor.u32 %s102, %s103
      %p105 = scmp.eq.s32.totalorder %s104, 0
      %s107 = sadd.s32 %s106, 1
      %s108 = scalar_select %p105, %s106, %s107
      %p111 = pneg %p105
      %p112 = scmp.eq.s32.totalorder %s12, 1
      %p113 = por %p111, %p112
      %p114 = scmp.ne.s32.totalorder %s106, %s109
      %p115 = scmp.eq.s32.totalorder %s12, 0
      %p116 = por %p114, %p115
      %p117 = scmp.ne.s32.totalorder %s106, %s109
      %p118 = scmp.eq.s32.totalorder %s17, 1
      %p119 = por %p117, %p118
      %p120 = scmp.ne.s32.totalorder %s109, %s110
      %p121 = scmp.eq.s32.totalorder %s17, 0
      %p122 = por %p120, %p121
      %p123 = scmp.ne.s32.totalorder %s109, %s110
      %p124 = scmp.eq.s32.totalorder %s18, 1
      %p125 = por %p123, %p124
      %p127 = scmp.ne.s32.totalorder %s110, %s126
      %p128 = scmp.eq.s32.totalorder %s18, 0
      %p129 = por %p127, %p128
      %p130 = scmp.le.s32.totalorder 1, %s12
      %p131 = scmp.lt.s32.totalorder %s12, 3
      %p132 = pnand %p130, %p131
      %p133 = pneg %p132
      // Predicated region
      $region9: #{tpu_custom_call.1} parent=5 // pred_check
        _
      $region10: #{tpu_custom_call.1} parent=5 // pred_check_branch
        %135 = sbr.rel (%p132) target = $region12
      $region11: #{tpu_custom_call.1} parent=5 // pred_region
        %s136 = ssub.s32 %s12, 1
        // Predicated region
        $region13: #{tpu_custom_call.1} parent=11 // pred_check
          %p137 = pneg %p73
        $region14: #{tpu_custom_call.1} parent=11 // pred_check_branch
          %139 = sbr.rel (%p137) target = $region16
        $region15: #{tpu_custom_call.1} parent=11 // pred_region
          _
        $region16: #{tpu_custom_call.1} parent=11 // pred_fallthru
          _
        // Predicated region
        $region17: #{tpu_custom_call.1} parent=11 // pred_check
          %p140 = pneg %p94
        $region18: #{tpu_custom_call.1} parent=11 // pred_check_branch
          %142 = sbr.rel (%p140) target = $region20
        $region19: #{tpu_custom_call.1} parent=11 // pred_region
          _
        $region20: #{tpu_custom_call.1} parent=11 // pred_fallthru
          _
      $region12: #{tpu_custom_call.1} parent=5 // pred_fallthru
        _
      %p143 = scmp.lt.s32.totalorder %s12, 2
      // Predicated region
      $region21: #{tpu_custom_call.1} parent=5 // pred_check
        %p144 = pneg %p143
      $region22: #{tpu_custom_call.1} parent=5 // pred_check_branch
        %146 = sbr.rel (%p144) target = $region24
      $region23: #{tpu_custom_call.1} parent=5 // pred_region
        // Predicated region
        $region25: #{tpu_custom_call.1} parent=23 // pred_check
          %p147 = pneg %p46
        $region26: #{tpu_custom_call.1} parent=23 // pred_check_branch
          %149 = sbr.rel (%p147) target = $region28
        $region27: #{tpu_custom_call.1} parent=23 // pred_region
          %p150 = scmp.lt.s32.totalorder %s19, 1
          %s151 = scalar_select %p150, %s19, 1
          %p152 = scmp.lt.s32.totalorder %s20, 0
          %s153 = scalar_select %p152, %s20, 0
          %s154 = smul.addr %s151, 4
          %s155 = sadd.s32 %s153, %s154
          %s156 = smul.addr %s155, 8
          %s157 = scalar_lea.vmem %s0, %s156
        $region28: #{tpu_custom_call.1} parent=23 // pred_fallthru
          _
      $region24: #{tpu_custom_call.1} parent=5 // pred_fallthru
        _
      %p158 = scmp.le.s32.totalorder 1, %s12
      %p159 = scmp.lt.s32.totalorder %s12, 3
      %p160 = pnand %p158, %p159
      %p161 = pneg %p160
      // Predicated region
      $region29: #{tpu_custom_call.1} parent=5 // pred_check
        _
      $region30: #{tpu_custom_call.1} parent=5 // pred_check_branch
        %163 = sbr.rel (%p160) target = $region32
      $region31: #{tpu_custom_call.1} parent=5 // pred_region
        %s164 = ssub.s32 %s12, 1
        %p165 = scmp.lt.s32.totalorder %s21, 1
        %s166 = scalar_select %p165, %s21, 1
        %p167 = scmp.lt.s32.totalorder %s22, 0
        %s168 = scalar_select %p167, %s22, 0
        %s169 = smul.addr %s166, 4
        %s170 = sadd.s32 %s168, %s169
        %s171 = smul.addr %s170, 8
        %s172 = scalar_lea.vmem %s0, %s171
        %p173 = pneg %p52
        %p174 = pneg %p49
        %p175 = pneg %p73
        %p176 = pneg %p70
        %p177 = pneg %p94
        %p178 = pneg %p91
        %p179 = pneg %p122
        %p180 = pneg %p119
        %s181 = sand.u32 %s109, 1
        %s182 = scalar_lea.sflag [#allocation3], %s181
        %s183 = sand.u32 %s109, 1
        %s184 = smul.addr %s183, 32
        %s185 = scalar_lea.vmem [#allocation2], %s184
        %p186 = scmp.lt.s32.totalorder %s21, 1
        %s187 = scalar_select %p186, %s21, 1
        %p188 = scmp.lt.s32.totalorder %s22, 0
        %s189 = scalar_select %p188, %s22, 0
        %s190 = smul.addr %s187, 4
        %s191 = sadd.s32 %s189, %s190
        %s192 = smul.addr %s191, 8
        %s193 = scalar_lea.vmem %s0, %s192
        %v194 = vld [vmem:[%s193] sm:$0xff]
        %v195 = vld [vmem:[%s193 + $0x8] sm:$0xff]
        %v196 = vld [vmem:[%s193 + $0x10] sm:$0xff]
        %v197 = vld [vmem:[%s193 + $0x18] sm:$0xff]
        %vm198 = vcmask 523264
        %v199 = vsel %vm198, %v194, 0.0
        %v200 = vsel %vm198, %v195, 0.0
        %v201 = vadd.f32 %v199, %v200
        %v202 = vsel %vm198, %v196, 0.0
        %v203 = vadd.f32 %v201, %v202
        %v204 = vsel %vm198, %v197, 0.0
        %v205 = vadd.f32 %v203, %v204
        %v206 = vrot.slane %v205, 4
        %v207 = vadd.f32 %v205, %v206
        %v208 = vrot.slane %v207, 2
        %v209 = vadd.f32 %v207, %v208
        %v210 = vrot.slane %v209, 1
        %v211 = vadd.f32 %v209, %v210
        %v212 = vrcp.pop 32.0
        %v213 = vmul.f32 %v211, %v212
        %v214 = vsub.f32 %v194, %v213
        %v215 = vsub.f32 %v195, %v213
        %v216 = vsub.f32 %v196, %v213
        %v217 = vsub.f32 %v197, %v213
        %v218 = vmul.f32 %v214, %v214
        %v219 = vmul.f32 %v215, %v215
        %v220 = vmul.f32 %v216, %v216
        %v221 = vmul.f32 %v217, %v217
        %v222 = vsel %vm198, %v218, 0.0
        %v223 = vsel %vm198, %v219, 0.0
        %v224 = vadd.f32 %v222, %v223
        %v225 = vsel %vm198, %v220, 0.0
        %v226 = vadd.f32 %v224, %v225
        %v227 = vsel %vm198, %v221, 0.0
        %v228 = vadd.f32 %v226, %v227
        %v229 = vrot.slane %v228, 4
        %v230 = vadd.f32 %v228, %v229
        %v231 = vrot.slane %v230, 2
        %v232 = vadd.f32 %v230, %v231
        %v233 = vrot.slane %v232, 1
        %v234 = vadd.f32 %v232, %v233
        %v235 = vmul.f32 %v234, %v212
        %v236 = vadd.f32 %v235, 1e-06
        %v237 = vrsqrt.pop %v236
        %v238 = vld [vmem:[%s1] sm:$0xff]
        %v239 = vld [vmem:[%s1 + $0x8] sm:$0xff]
        %v240 = vld [vmem:[%s1 + $0x10] sm:$0xff]
        %v241 = vld [vmem:[%s1 + $0x18] sm:$0xff]
        %v242 = vld [vmem:[%s2] sm:$0xff]
        %v243 = vld [vmem:[%s2 + $0x8] sm:$0xff]
        %v244 = vld [vmem:[%s2 + $0x10] sm:$0xff]
        %v245 = vld [vmem:[%s2 + $0x18] sm:$0xff]
        %247 = vset.pattern.permute.xlu0 0
        %248 = vperm.xlu0 %247, %v238
        %v249 = vpop.permute.xlu0 %248
        %252 = vset.pattern.permute.xlu0 0
        %253 = vperm.xlu0 %252, %v239
        %v254 = vpop.permute.xlu0 %253
        %257 = vset.pattern.permute.xlu0 0
        %258 = vperm.xlu0 %257, %v240
        %v259 = vpop.permute.xlu0 %258
        %262 = vset.pattern.permute.xlu0 0
        %263 = vperm.xlu0 %262, %v241
        %v264 = vpop.permute.xlu0 %263
        %v266 = vmul.f32 %v237, %v249
        %v267 = vmul.f32 %v237, %v254
        %v268 = vmul.f32 %v237, %v259
        %v269 = vmul.f32 %v237, %v264
        %v270 = vmul.f32 %v214, %v266
        %v271 = vmul.f32 %v215, %v267
        %v272 = vmul.f32 %v216, %v268
        %v273 = vmul.f32 %v217, %v269
        %275 = vset.pattern.permute.xlu0 0
        %276 = vperm.xlu0 %275, %v242
        %v277 = vpop.permute.xlu0 %276
        %280 = vset.pattern.permute.xlu0 0
        %281 = vperm.xlu0 %280, %v243
        %v282 = vpop.permute.xlu0 %281
        %285 = vset.pattern.permute.xlu0 0
        %286 = vperm.xlu0 %285, %v244
        %v287 = vpop.permute.xlu0 %286
        %290 = vset.pattern.permute.xlu0 0
        %291 = vperm.xlu0 %290, %v245
        %v292 = vpop.permute.xlu0 %291
        %v294 = vadd.f32 %v270, %v277
        %v295 = vadd.f32 %v271, %v282
        %v296 = vadd.f32 %v272, %v287
        %v297 = vadd.f32 %v273, %v292
        %298 = vst.msk [vmem:[%s185] sm:$0xff] %vm198, %v294
        %299 = vst.msk [vmem:[%s185 + $0x8] sm:$0xff] %vm198, %v295
        %300 = vst.msk [vmem:[%s185 + $0x10] sm:$0xff] %vm198, %v296
        %301 = vst.msk [vmem:[%s185 + $0x18] sm:$0xff] %vm198, %v297
        %s302 = sand.u32 %s109, 1
        %s303 = scalar_lea.sflag [#allocation3], %s302
        %s304 = sand.u32 %s109, 1
        %s305 = smul.addr %s304, 32
        %s306 = scalar_lea.vmem [#allocation2], %s305
        // Predicated region
        $region33: #{tpu_custom_call.1} parent=31 // pred_check
          %p307 = pneg %p119
        $region34: #{tpu_custom_call.1} parent=31 // pred_check_branch
          %309 = sbr.rel (%p307) target = $region36
        $region35: #{tpu_custom_call.1} parent=31 // pred_region
          %s311 = ssub.s32 512, 512
          %312 = vsyncadd %s303, %s311
          %s313 = smul.addr %s21, 4
          %s314 = sadd.s32 %s22, %s313
          %s315 = smul.addr %s314, 128
          %s316 = scalar_lea.hbm %s3, %s315
          %s317 = sshll.u32 %s306, 4
          %s318 = int_to_ptr.vmem [resolvable:$true] %s317
          %323 = dma.vmem_to_hbm [thread:$0]  %s318, 512, %s316, %s303, 128, 128, 8
        $region36: #{tpu_custom_call.1} parent=31 // pred_fallthru
          _
      $region32: #{tpu_custom_call.1} parent=5 // pred_fallthru
        _
      %p324 = scmp.le.s32.totalorder 2, %s12
      // Predicated region
      $region37: #{tpu_custom_call.1} parent=5 // pred_check
        %p325 = pneg %p324
      $region38: #{tpu_custom_call.1} parent=5 // pred_check_branch
        %327 = sbr.rel (%p325) target = $region40
      $region39: #{tpu_custom_call.1} parent=5 // pred_region
        %s328 = ssub.s32 %s12, 2
        // Predicated region
        $region41: #{tpu_custom_call.1} parent=39 // pred_check
          %p329 = pneg %p125
        $region42: #{tpu_custom_call.1} parent=39 // pred_check_branch
          %331 = sbr.rel (%p329) target = $region44
        $region43: #{tpu_custom_call.1} parent=39 // pred_region
          %s332 = sand.u32 %s110, 1
          %s333 = scalar_lea.sflag [#allocation3], %s332
          %s334 = sand.u32 %s110, 1
          %s335 = smul.addr %s334, 32
          %s336 = scalar_lea.vmem [#allocation2], %s335
          %337 = dma.done %s333, 512
        $region44: #{tpu_custom_call.1} parent=39 // pred_fallthru
          _
      $region40: #{tpu_custom_call.1} parent=5 // pred_fallthru
        _
    $region6: #{tpu_custom_call.1} parent=1 // loop_footer
      %s16 = sadd.s32 1, %s12
    $region7: #{tpu_custom_call.1} parent=1 // loop_footer_branch
      %11 = sbr.rel target = $region3
    $region8: #{tpu_custom_call.1} parent=1 // loop_exit
      _
    %338 = vsyncpa [#allocation3], 1
    %s339 = scalar_lea.sflag [#allocation3], 1
    %340 = vsyncpa %s339, 1

</llo_original>
